<compile_context>
chip_gen: v6e
topology: v6e:2x2x1
jax: 0.10.0
libtpu: 0.0.40
codegen_flags: <defaults>
</compile_context>

<pallas_src>
import functools

import jax
import jax.numpy as jnp
import numpy as np
from jax.experimental import pallas as pl
from jax.experimental.pallas import tpu as pltpu


def _round_up(x, m):
    return ((x + m - 1) // m) * m


def _choose_f_chunk(F, H, w_itemsize, budget_bytes=24 << 20):
    """Largest F-chunk (dividing F, preferring multiples of 128) whose double-buffered
    fused-W13 + W2 chunks fit the weight-VMEM budget (sized with v7x's 64 MiB in mind)."""
    def chunk_bytes(c):
        # double-buffered W13 chunk (H x 2c) + W2 chunk (c x H)
        return 2 * (H * 2 * c + c * H) * w_itemsize

    if chunk_bytes(F) <= budget_bytes:
        return F
    cands = [c for c in range(128, F, 128) if F % c == 0]
    for c in sorted(cands, reverse=True):
        if chunk_bytes(c) <= budget_bytes:
            return c
    return min(cands) if cands else F


def _moe_expert_kernel(flags_ref, fetch_e_ref, fetch_f_ref,
                       x_ref, w13_ref, w2_ref, rw_ref, o_ref, *scratch, fc):
    """Grid = (token_tile, expert, f_chunk).  Expert / F-chunk axes are accumulation axes."""
    t = pl.program_id(0)
    e = pl.program_id(1)
    f = pl.program_id(2)
    n_e = pl.num_programs(1)
    n_f = pl.num_programs(2)

    # Accumulate directly into the (resident) output block when it is f32; otherwise use
    # the f32 VMEM scratch and cast once at the very end.
    acc_ref = scratch[0] if scratch else o_ref

    @pl.when((e == 0) & (f == 0))
    def _():
        acc_ref[...] = jnp.zeros_like(acc_ref)

    # Skip experts that have no routed tokens inside this token tile.  Both the compute
    # AND the weight DMA are skipped (the weight index_maps repeat the previous block
    # index on inactive steps, so Pallas issues no new weight DMA).
    @pl.when(flags_ref[t * n_e + e] != 0)
    def _():
        x = x_ref[...]                                                   # (tt, H) compute dtype
        # Fused up-projection: one dot against [W1_chunk | W3_chunk].
        h13 = jnp.dot(x, w13_ref[...], preferred_element_type=jnp.float32)   # (tt, 2*fc)
        h1 = h13[:, :fc]
        h3 = h13[:, fc:]
        g = h1 * jax.nn.sigmoid(h1) * h3                                 # SiLU gate in f32 (v5e-safe)

        # Select this expert's routing-weight column from the resident (tt, E) block.
        rw = rw_ref[...]                                                 # (tt, E) f32; 0 if unrouted
        lane = jax.lax.broadcasted_iota(jnp.int32, rw.shape, 1)
        rw_e = jnp.sum(jnp.where(lane == e, rw, 0.0), axis=-1, keepdims=True)   # (tt, 1)

        # Fold routing weight into the gate -> pure matmul-accumulate down-projection.
        g_scaled = (g * rw_e).astype(w2_ref.dtype)                       # (tt, fc)
        acc_ref[...] += jnp.dot(g_scaled, w2_ref[...], preferred_element_type=jnp.float32)

    if scratch:
        @pl.when((e == n_e - 1) & (f == n_f - 1))
        def _():
            o_ref[...] = acc_ref[...].astype(o_ref.dtype)                # single lane-dense store


def moe_experts_pallas(x_flat, w1_stack, w3_stack, w2_stack, dense_routing,
                       *, token_tile=512, compute_dtype=None, f_tile=None):
    """x_flat: (T, H); w1/w3: (E, H, F); w2: (E, F, H); dense_routing: (T, E) f32."""
    T, H = x_flat.shape
    E, _, F = w1_stack.shape
    out_dtype = x_flat.dtype
    if compute_dtype is None:
        compute_dtype = x_flat.dtype

    w_item = np.dtype(compute_dtype).itemsize
    x_item = w_item                                   # x is cast to compute dtype in the wrapper
    o_item = np.dtype(out_dtype).itemsize

    # Token tiling.  bf16 packs 2 rows/sublane -> 16-row alignment; f32 -> 8.
    sub = 16 if (w_item == 2 or o_item == 2) else 8
    t_full = _round_up(T, sub)
    tt = min(_round_up(token_tile, sub), t_full)
    if t_full >= 2 * sub:                             # >= 2 token tiles so v7x's 2nd TC has work
        tt = min(tt, _round_up(t_full // 2, sub))
    T_pad = _round_up(T, tt)
    num_tiles = T_pad // tt

    if T_pad != T:
        pad = T_pad - T
        x_flat = jnp.pad(x_flat, ((0, pad), (0, 0)))
        dense_routing = jnp.pad(dense_routing, ((0, pad), (0, 0)))

    x_c = x_flat.astype(compute_dtype)                # cast once here, not per expert in-kernel
    rw = dense_routing.astype(jnp.float32)            # (T_pad, E)

    # F tiling: cap per-step weight residency (v7x only has 64 MiB of VMEM).
    fc = _choose_f_chunk(F, H, w_item) if f_tile is None else f_tile
    assert F % fc == 0, "f_tile must divide F"
    num_f = F // fc

    # Fused, F-chunk-interleaved W13: last-axis chunk j (width 2*fc) = [W1[:,:,j] | W3[:,:,j]].
    w13 = jnp.concatenate(
        [w1_stack.reshape(E, H, num_f, 1, fc), w3_stack.reshape(E, H, num_f, 1, fc)],
        axis=3).reshape(E, H, 2 * F).astype(compute_dtype)
    w2_c = w2_stack.astype(compute_dtype)             # (E, F, H)
    # TODO(synk): on v7x, store weights as fp8(e4m3) + per-expert scales folded into rw_e to
    # halve weight HBM traffic again (the v7x MXU has no int support, so no int8 path).

    # ---- scalar-prefetch tables (SMEM) ----
    # Per-(tile, expert) "has routed tokens" flags, flattened to 1D.
    flags = jnp.any(rw.reshape(num_tiles, tt, E) != 0.0, axis=1)          # (num_tiles, E) bool
    flags_flat = flags.astype(jnp.int32).reshape(-1)
    # Per grid-step weight fetch indices: on inactive steps repeat the previously fetched
    # (expert, f-chunk), so the block index is unchanged and Pallas skips the weight DMA.
    steps = num_tiles * E * num_f
    active = jnp.broadcast_to(flags[:, :, None], (num_tiles, E, num_f)).reshape(-1)
    lin = jnp.arange(steps, dtype=jnp.int32)
    last_active = jnp.maximum(jax.lax.cummax(jnp.where(active, lin, -1), axis=0), 0)
    fetch_e = ((last_active // num_f) % E).astype(jnp.int32)
    fetch_f = (last_active % num_f).astype(jnp.int32)

    use_scratch = np.dtype(out_dtype) != np.dtype(jnp.float32)
    scratch_shapes = [pltpu.VMEM((tt, H), jnp.float32)] if use_scratch else []

    def _step(t, e, f):
        return (t * E + e) * num_f + f

    # TODO(synk): pl.Buffered(3) on the weight specs would hide DMA latency behind skipped
    # steps when VMEM headroom allows; left at the default 2-deep pipeline for safety.
    in_specs = [
        pl.BlockSpec((tt, H), lambda t, e, f, fl, fe, ff: (t, 0)),                       # x tile
        pl.BlockSpec((None, H, 2 * fc),
                     lambda t, e, f, fl, fe, ff: (fe[_step(t, e, f)], 0, ff[_step(t, e, f)])),  # W13 chunk
        pl.BlockSpec((None, fc, H),
                     lambda t, e, f, fl, fe, ff: (fe[_step(t, e, f)], ff[_step(t, e, f)], 0)),  # W2 chunk
        pl.BlockSpec((tt, E), lambda t, e, f, fl, fe, ff: (t, 0)),                       # routing
    ]
    out_spec = pl.BlockSpec((tt, H), lambda t, e, f, fl, fe, ff: (t, 0))

    # VMEM budget (double-buffered in/out + optional f32 accumulator), capped for v7x (64 MiB).
    vmem_est = (2 * tt * H * x_item
                + 2 * H * 2 * fc * w_item
                + 2 * fc * H * w_item
                + 2 * tt * E * 4
                + 2 * tt * H * o_item
                + (tt * H * 4 if use_scratch else 0))
    vmem_limit = int(min(max(2 * vmem_est, 16 << 20), 56 << 20))

    cost = pl.CostEstimate(
        flops=6 * T_pad * H * F * E,                      # dense upper bound (flag-skip lowers it)
        transcendentals=T_pad * F * E,                    # sigmoid in SiLU
        bytes_accessed=(T_pad * H * x_item + T_pad * E * 4 + T_pad * H * o_item
                        + num_tiles * E * 3 * H * F * w_item),   # weights re-streamed per token tile
    )

    kernel = functools.partial(_moe_expert_kernel, fc=fc)
    out = pl.pallas_call(
        kernel,
        out_shape=jax.ShapeDtypeStruct((T_pad, H), out_dtype),
        grid_spec=pltpu.PrefetchScalarGridSpec(
            num_scalar_prefetch=3,                        # flags, fetch_e, fetch_f -> SMEM
            grid=(num_tiles, E, num_f),
            in_specs=in_specs,
            out_specs=out_spec,
            scratch_shapes=scratch_shapes,
        ),
        compiler_params=pltpu.CompilerParams(
            dimension_semantics=("parallel", "arbitrary", "arbitrary"),
            vmem_limit_bytes=vmem_limit,
        ),
        cost_estimate=cost,
    )(flags_flat, fetch_e, fetch_f, x_c, w13, w2_c, rw)

    return out[:T]


def block_sparse_moe(x, gate_w, w1_stack, w3_stack, w2_stack, top_k=2,
                     *, compute_dtype=None, token_tile=512, f_tile=None):
    """Full BlockSparseMoE forward. x: (B, S, H); gate_w: (E, H) (PyTorch Linear layout)."""
    B, S, H = x.shape
    x_flat = x.reshape(-1, H)
    T = x_flat.shape[0]
    E = gate_w.shape[0]

    # Router (JAX glue, identical to the PyTorch module).
    logits = x_flat @ gate_w.T                                     # (T, E)
    probs = jax.nn.softmax(logits.astype(jnp.float32), axis=-1)    # fp32 softmax
    top_vals, top_idx = jax.lax.top_k(probs, top_k)
    top_vals = top_vals / jnp.sum(top_vals, axis=-1, keepdims=True)
    # Dense (T, E) routing-weight scatter (0 for unrouted experts).  Tokens whose renormalized
    # top-k weight is exactly 0 would be skipped by the flags; benign for softmax top-2.
    dense = jnp.zeros((T, E), jnp.float32)
    dense = dense.at[jnp.arange(T)[:, None], top_idx].set(top_vals)
    # TODO(synk): for large num_experts, a grouped/sorted-token formulation (group offsets
    # driving the LHS index_map) would scale FLOPs/DMA with top_k rather than E.

    out_flat = moe_experts_pallas(x_flat, w1_stack, w3_stack, w2_stack, dense,
                                  token_tile=token_tile, compute_dtype=compute_dtype,
                                  f_tile=f_tile)
    return out_flat.reshape(B, S, H)


def _reference_moe(x, gate_w, w1_stack, w3_stack, w2_stack, top_k=2, compute_dtype=None):
    """Pure-JAX reference mirroring the PyTorch module (dense-masked formulation)."""
    B, S, H = x.shape
    x_flat = x.reshape(-1, H)
    T = x_flat.shape[0]
    E = gate_w.shape[0]
    if compute_dtype is None:
        compute_dtype = x.dtype

    logits = x_flat @ gate_w.T
    probs = jax.nn.softmax(logits.astype(jnp.float32), axis=-1)
    top_vals, top_idx = jax.lax.top_k(probs, top_k)
    top_vals = top_vals / jnp.sum(top_vals, axis=-1, keepdims=True)
    dense = jnp.zeros((T, E), jnp.float32)
    dense = dense.at[jnp.arange(T)[:, None], top_idx].set(top_vals)

    x_c = x_flat.astype(compute_dtype)
    out = jnp.zeros((T, H), jnp.float32)
    for e in range(E):
        h1 = jnp.dot(x_c, w1_stack[e].astype(compute_dtype), preferred_element_type=jnp.float32)
        h3 = jnp.dot(x_c, w3_stack[e].astype(compute_dtype), preferred_element_type=jnp.float32)
        g = h1 * jax.nn.sigmoid(h1) * h3
        y = jnp.dot(g.astype(compute_dtype), w2_stack[e].astype(compute_dtype),
                    preferred_element_type=jnp.float32)
        out = out + y * dense[:, e:e + 1]
    return out.astype(x.dtype).reshape(B, S, H)


if __name__ == "__main__":
    # Module defaults: hidden_size=64, num_experts=3, intermediate_size=32, top_k=2;
    # batch=2, seq=8.
    B, S, H, F, E = 2, 8, 64, 32, 3
    dtype = jnp.float32

    key = jax.random.PRNGKey(0)
    kx, kg, k1, k2, k3 = jax.random.split(key, 5)

    x = jax.random.normal(kx, (B, S, H), dtype)
    gate_w = jax.random.normal(kg, (E, H), dtype) * 0.05            # PyTorch Linear layout (out, in)
    # Expert weights pre-transposed to (in, out) so the kernel computes x @ W.
    w1_stack = jax.random.normal(k1, (E, H, F), dtype) * 0.05
    w3_stack = jax.random.normal(k3, (E, H, F), dtype) * 0.05
    w2_stack = jax.random.normal(k2, (E, F, H), dtype) * 0.05

    # 1) Exact f32 path (direct o_ref accumulation, no scratch) — matches the PyTorch module.
    out_f32 = jax.block_until_ready(block_sparse_moe(
        x, gate_w, w1_stack, w3_stack, w2_stack, compute_dtype=jnp.float32))
    ref_f32 = _reference_moe(x, gate_w, w1_stack, w3_stack, w2_stack, compute_dtype=jnp.float32)
    assert out_f32.shape == (B, S, H)
    assert jnp.allclose(out_f32, ref_f32, atol=2e-3, rtol=2e-2), "f32 mismatch vs reference"

    # 2) bf16 MXU path with f32 I/O (bf16 dots, f32 gate + f32 accumulation).
    out_bf = jax.block_until_ready(block_sparse_moe(
        x, gate_w, w1_stack, w3_stack, w2_stack, compute_dtype=jnp.bfloat16))
    ref_bf = _reference_moe(x, gate_w, w1_stack, w3_stack, w2_stack, compute_dtype=jnp.bfloat16)
    assert jnp.allclose(out_bf, ref_bf, atol=2e-3, rtol=2e-2), "bf16 mismatch vs bf16 reference"
    assert jnp.allclose(out_bf, ref_f32, atol=5e-3, rtol=5e-2), "bf16 path drifted from f32 reference"

    # 3) bf16 I/O path (exercises the f32 scratch accumulator + final bf16 store).
    x_bf = x.astype(jnp.bfloat16)
    gate_bf = gate_w.astype(jnp.bfloat16)
    out_bf_io = jax.block_until_ready(block_sparse_moe(
        x_bf, gate_bf, w1_stack, w3_stack, w2_stack, compute_dtype=jnp.bfloat16))
    ref_bf_io = _reference_moe(x_bf, gate_bf, w1_stack, w3_stack, w2_stack,
                               compute_dtype=jnp.bfloat16)
    assert jnp.allclose(out_bf_io.astype(jnp.float32), ref_bf_io.astype(jnp.float32),
                        atol=1e-2, rtol=1e-1), "bf16-I/O mismatch vs bf16 reference"

    print("KERNEL_OK")
</pallas_src>

<mosaic_0001>
module attributes {stable_mosaic.version = 11 : i64} {
  func.func @_moe_expert_kernel(%arg0: i32, %arg1: i32, %arg2: i32, %arg3: memref<6xi32, #tpu.memory_space<smem>>, %arg4: memref<6xi32, #tpu.memory_space<smem>>, %arg5: memref<6xi32, #tpu.memory_space<smem>>, %arg6: memref<8x64xf32, #tpu.memory_space<vmem>>, %arg7: memref<1x64x64xf32, #tpu.memory_space<vmem>>, %arg8: memref<1x32x64xf32, #tpu.memory_space<vmem>>, %arg9: memref<8x3xf32, #tpu.memory_space<vmem>>, %arg10: memref<8x64xf32, #tpu.memory_space<vmem>>) attributes {dimension_semantics = [#tpu.dimension_semantics<parallel>, #tpu.dimension_semantics<arbitrary>, #tpu.dimension_semantics<arbitrary>], iteration_bounds = array<i64: 2, 3, 1>, scalar_prefetch = 3 : i64, scratch_operands = 0 : i64, tpu.core_type = #tpu.core_type<tc>, window_params = [{transform_indices = @transform_0, window_bounds = array<i64: 8, 64>}, {transform_indices = @transform_1, window_bounds = array<i64: 1, 64, 64>}, {transform_indices = @transform_2, window_bounds = array<i64: 1, 32, 64>}, {transform_indices = @transform_3, window_bounds = array<i64: 8, 3>}, {transform_indices = @transform_4, window_bounds = array<i64: 8, 64>}]} {
    %c0_i32 = arith.constant 0 : i32
    %0 = arith.cmpi eq, %arg1, %c0_i32 : i32
    %c0_i32_0 = arith.constant 0 : i32
    %1 = arith.cmpi eq, %arg2, %c0_i32_0 : i32
    %2 = arith.andi %0, %1 : i1
    %3 = arith.extui %2 : i1 to i32
    %c0_i32_1 = arith.constant 0 : i32
    %4 = arith.cmpi ne, %3, %c0_i32_1 : i32
    scf.if %4 {
      %cst = arith.constant 0.000000e+00 : f32
      %12 = vector.broadcast %cst : f32 to vector<8x64xf32>
      %c0 = arith.constant 0 : index
      %c0_4 = arith.constant 0 : index
      %13 = vector.load %arg10[%c0, %c0_4] : memref<8x64xf32, #tpu.memory_space<vmem>>, vector<8x64xf32>
      tpu.vector_store %arg10[%c0, %c0_4], %12 {strides = array<i32>} : memref<8x64xf32, #tpu.memory_space<vmem>>, vector<8x64xf32>,
    } else {
    }
    %c3_i32 = arith.constant 3 : i32
    %5 = arith.muli %arg0, %c3_i32 : i32
    %6 = arith.addi %5, %arg1 : i32
    %7 = arith.index_cast %6 : i32 to index
    %8 = memref.load %arg3[%7] : memref<6xi32, #tpu.memory_space<smem>>
    %c0_i32_2 = arith.constant 0 : i32
    %9 = arith.cmpi ne, %8, %c0_i32_2 : i32
    %10 = arith.extui %9 : i1 to i32
    %c0_i32_3 = arith.constant 0 : i32
    %11 = arith.cmpi ne, %10, %c0_i32_3 : i32
    scf.if %11 {
      %c0 = arith.constant 0 : index
      %c0_4 = arith.constant 0 : index
      %12 = vector.load %arg6[%c0, %c0_4] : memref<8x64xf32, #tpu.memory_space<vmem>>, vector<8x64xf32>
      %c0_5 = arith.constant 0 : index
      %c0_6 = arith.constant 0 : index
      %c0_7 = arith.constant 0 : index
      %13 = vector.load %arg7[%c0_5, %c0_6, %c0_7] : memref<1x64x64xf32, #tpu.memory_space<vmem>>, vector<1x64x64xf32>
      %14 = vector.shape_cast %13 : vector<1x64x64xf32> to vector<64x64xf32>
      %cst = arith.constant dense<0.000000e+00> : vector<8x64xf32>
      %15 = tpu.matmul %12, %14, %cst {dimension_numbers = #tpu.dot_dimension_numbers<[1], [0], [0], [1], [0, 0, 1, 1], [], []>} : vector<8x64xf32>, vector<64x64xf32>, vector<8x64xf32> -> vector<8x64xf32>
      %16 = vector.extract_strided_slice %15 {offsets = [0, 0], sizes = [8, 32], strides = [1, 1]} : vector<8x64xf32> to vector<8x32xf32>
      %17 = vector.extract_strided_slice %15 {offsets = [0, 32], sizes = [8, 32], strides = [1, 1]} : vector<8x64xf32> to vector<8x32xf32>
      %18 = arith.negf %16 : vector<8x32xf32>
      %19 = math.exp %18 : vector<8x32xf32>
      %cst_8 = arith.constant 1.000000e+00 : f32
      %20 = vector.broadcast %cst_8 : f32 to vector<8x32xf32>
      %21 = arith.addf %20, %19 : vector<8x32xf32>
      %22 = arith.divf %20, %21 : vector<8x32xf32>
      %23 = arith.mulf %16, %22 : vector<8x32xf32>
      %24 = arith.mulf %23, %17 : vector<8x32xf32>
      %c0_9 = arith.constant 0 : index
      %c0_10 = arith.constant 0 : index
      %25 = vector.load %arg9[%c0_9, %c0_10] : memref<8x3xf32, #tpu.memory_space<vmem>>, vector<8x3xf32>
      %26 = tpu.iota {dimensions = array<i32: 1>} : vector<8x3xi32>
      %27 = vector.broadcast %arg1 : i32 to vector<8x3xi32>
      %28 = arith.cmpi eq, %26, %27 : vector<8x3xi32>
      %cst_11 = arith.constant 0.000000e+00 : f32
      %29 = vector.broadcast %cst_11 : f32 to vector<8x3xf32>
      %30 = arith.select %28, %25, %29 : vector<8x3xi1>, vector<8x3xf32>
      %cst_12 = arith.constant dense<0.000000e+00> : vector<8xf32>
      %31 = vector.multi_reduction <add>, %30, %cst_12 [1] : vector<8x3xf32> to vector<8xf32>
      %32 = vector.shape_cast %31 : vector<8xf32> to vector<8x1xf32>
      %33 = vector.broadcast %32 : vector<8x1xf32> to vector<8x32xf32>
      %34 = arith.mulf %24, %33 : vector<8x32xf32>
      %c0_13 = arith.constant 0 : index
      %c0_14 = arith.constant 0 : index
      %35 = vector.load %arg10[%c0_13, %c0_14] : memref<8x64xf32, #tpu.memory_space<vmem>>, vector<8x64xf32>
      %c0_15 = arith.constant 0 : index
      %c0_16 = arith.constant 0 : index
      %c0_17 = arith.constant 0 : index
      %36 = vector.load %arg8[%c0_15, %c0_16, %c0_17] : memref<1x32x64xf32, #tpu.memory_space<vmem>>, vector<1x32x64xf32>
      %37 = vector.shape_cast %36 : vector<1x32x64xf32> to vector<32x64xf32>
      %cst_18 = arith.constant dense<0.000000e+00> : vector<8x64xf32>
      %38 = tpu.matmul %34, %37, %cst_18 {dimension_numbers = #tpu.dot_dimension_numbers<[1], [0], [0], [1], [0, 0, 1, 1], [], []>} : vector<8x32xf32>, vector<32x64xf32>, vector<8x64xf32> -> vector<8x64xf32>
      %39 = arith.addf %35, %38 : vector<8x64xf32>
      %c0_19 = arith.constant 0 : index
      %c0_20 = arith.constant 0 : index
      %40 = vector.load %arg10[%c0_19, %c0_20] : memref<8x64xf32, #tpu.memory_space<vmem>>, vector<8x64xf32>
      tpu.vector_store %arg10[%c0_19, %c0_20], %39 {strides = array<i32>} : memref<8x64xf32, #tpu.memory_space<vmem>>, vector<8x64xf32>,
    } else {
    }
    return
  }
  func.func @transform_0(%arg0: i32, %arg1: i32, %arg2: i32, %arg3: memref<6xi32, #tpu.memory_space<smem>>, %arg4: memref<6xi32, #tpu.memory_space<smem>>, %arg5: memref<6xi32, #tpu.memory_space<smem>>) -> (i32, i32) {
    %c0_i32 = arith.constant 0 : i32
    %c0_i32_0 = arith.constant 0 : i32
    return %arg0, %c0_i32 : i32, i32
  }
  func.func @transform_1(%arg0: i32, %arg1: i32, %arg2: i32, %arg3: memref<6xi32, #tpu.memory_space<smem>>, %arg4: memref<6xi32, #tpu.memory_space<smem>>, %arg5: memref<6xi32, #tpu.memory_space<smem>>) -> (i32, i32, i32) {
    %c3_i32 = arith.constant 3 : i32
    %0 = arith.muli %arg0, %c3_i32 : i32
    %1 = arith.addi %0, %arg1 : i32
    %c1_i32 = arith.constant 1 : i32
    %2 = arith.muli %1, %c1_i32 : i32
    %3 = arith.addi %2, %arg2 : i32
    %4 = arith.index_cast %3 : i32 to index
    %5 = memref.load %arg4[%4] : memref<6xi32, #tpu.memory_space<smem>>
    %c3_i32_0 = arith.constant 3 : i32
    %6 = arith.muli %arg0, %c3_i32_0 : i32
    %7 = arith.addi %6, %arg1 : i32
    %c1_i32_1 = arith.constant 1 : i32
    %8 = arith.muli %7, %c1_i32_1 : i32
    %9 = arith.addi %8, %arg2 : i32
    %10 = arith.index_cast %9 : i32 to index
    %11 = memref.load %arg5[%10] : memref<6xi32, #tpu.memory_space<smem>>
    %c0_i32 = arith.constant 0 : i32
    %c0_i32_2 = arith.constant 0 : i32
    return %5, %c0_i32, %11 : i32, i32, i32
  }
  func.func @transform_2(%arg0: i32, %arg1: i32, %arg2: i32, %arg3: memref<6xi32, #tpu.memory_space<smem>>, %arg4: memref<6xi32, #tpu.memory_space<smem>>, %arg5: memref<6xi32, #tpu.memory_space<smem>>) -> (i32, i32, i32) {
    %c3_i32 = arith.constant 3 : i32
    %0 = arith.muli %arg0, %c3_i32 : i32
    %1 = arith.addi %0, %arg1 : i32
    %c1_i32 = arith.constant 1 : i32
    %2 = arith.muli %1, %c1_i32 : i32
    %3 = arith.addi %2, %arg2 : i32
    %4 = arith.index_cast %3 : i32 to index
    %5 = memref.load %arg4[%4] : memref<6xi32, #tpu.memory_space<smem>>
    %c3_i32_0 = arith.constant 3 : i32
    %6 = arith.muli %arg0, %c3_i32_0 : i32
    %7 = arith.addi %6, %arg1 : i32
    %c1_i32_1 = arith.constant 1 : i32
    %8 = arith.muli %7, %c1_i32_1 : i32
    %9 = arith.addi %8, %arg2 : i32
    %10 = arith.index_cast %9 : i32 to index
    %11 = memref.load %arg5[%10] : memref<6xi32, #tpu.memory_space<smem>>
    %c0_i32 = arith.constant 0 : i32
    %c0_i32_2 = arith.constant 0 : i32
    return %5, %11, %c0_i32 : i32, i32, i32
  }
  func.func @transform_3(%arg0: i32, %arg1: i32, %arg2: i32, %arg3: memref<6xi32, #tpu.memory_space<smem>>, %arg4: memref<6xi32, #tpu.memory_space<smem>>, %arg5: memref<6xi32, #tpu.memory_space<smem>>) -> (i32, i32) {
    %c0_i32 = arith.constant 0 : i32
    %c0_i32_0 = arith.constant 0 : i32
    return %arg0, %c0_i32 : i32, i32
  }
  func.func @transform_4(%arg0: i32, %arg1: i32, %arg2: i32, %arg3: memref<6xi32, #tpu.memory_space<smem>>, %arg4: memref<6xi32, #tpu.memory_space<smem>>, %arg5: memref<6xi32, #tpu.memory_space<smem>>) -> (i32, i32) {
    %c0_i32 = arith.constant 0 : i32
    %c0_i32_0 = arith.constant 0 : i32
    return %arg0, %c0_i32 : i32, i32
  }
}

</mosaic_0001>

<llo_original>
// kernel: tpu_custom_call.1
$region0: #{tpu_custom_call.1}
  #allocation0 [shape = 'u32[]', space=smem, size = 0x4, offset = 0x4, fixed_abs, tag = 'smem constant byte address 0x4 - core index']
  #allocation1 [shape = 'u32[144,128]{1,0:T(1,128)}', space=vmem, size = 0x12000, scoped, tag = 'internal scratch']
  #allocation2 [shape = 's32[1]{0}', space=sflag, size = 0x4, scoped, tag = 'scoped memory for tpu_custom_call.1']
  #allocation3 [shape = 'u8[512]{0}', space=smem, size = 0x200, scoped, tag = 'prefetched SMEM operand 0']
  #allocation4 [shape = 'u8[512]{0}', space=smem, size = 0x200, scoped, tag = 'prefetched SMEM operand 1']
  #allocation5 [shape = 'u8[512]{0}', space=smem, size = 0x200, scoped, tag = 'prefetched SMEM operand 2']
  %s0 = inlined_call_operand.vmem [shape: s32[6], index: 0, kind: input, shape index: {}]
  %s1 = inlined_call_operand.vmem [shape: s32[6], index: 1, kind: input, shape index: {}]
  %s2 = inlined_call_operand.vmem [shape: s32[6], index: 2, kind: input, shape index: {}]
  %s3 = inlined_call_operand.vmem [shape: f32[16,64], index: 3, kind: input, shape index: {}]
  %s4 = inlined_call_operand.hbm [shape: f32[3,64,64], index: 4, kind: input, shape index: {}]
  %s5 = inlined_call_operand.hbm [shape: f32[3,32,64], index: 5, kind: input, shape index: {}]
  %s6 = inlined_call_operand.vmem [shape: f32[16,3], index: 6, kind: input, shape index: {}]
  %s7 = inlined_call_operand.hbm [shape: f32[16,64], index: 7, kind: output, shape index: {}]
  %s8 = sld [smem:[#allocation0]]
  $region65: #{tpu_custom_call.1} parent=0
    _
  %s10 = ssub.s32 1, %s8
  %s11 = scalar_select 0, %s10, %s8
  %s12 = sshll.u32 %s0, 4
  %s13 = int_to_ptr.vmem [resolvable:$true] %s12
  %15 = dma.vmem_to_smem %s13, 16, [#allocation3], [#allocation2]
  %s16 = sshll.u32 %s1, 4
  %s17 = int_to_ptr.vmem [resolvable:$true] %s16
  %19 = dma.vmem_to_smem %s17, 16, [#allocation4], [#allocation2]
  %s20 = sshll.u32 %s2, 4
  %s21 = int_to_ptr.vmem [resolvable:$true] %s20
  %23 = dma.vmem_to_smem %s21, 16, [#allocation5], [#allocation2]
  %24 = dma.done [#allocation2], 48
  %25 = sfence
  $region1: #{tpu_custom_call.1} parent=0
    #allocation6 [shape = 'u8[65536]{0}', space=vmem, size = 0x10000, scoped, tag = 'input window, operand 4']
    #allocation7 [shape = 's32[2]{0}', space=sflag, size = 0x8, scoped, tag = 'scoped memory for tpu_custom_call.1']
    #allocation8 [shape = 's32[2]{0}', space=sflag, size = 0x8, scoped, tag = 'scoped memory for tpu_custom_call.1']
    #allocation9 [shape = 'u8[32768]{0}', space=vmem, size = 0x8000, scoped, tag = 'input window, operand 5']
    #allocation10 [shape = 's32[2]{0}', space=sflag, size = 0x8, scoped, tag = 'scoped memory for tpu_custom_call.1']
    #allocation11 [shape = 'u8[8192]{0}', space=vmem, size = 0x2000, scoped, tag = 'output window, operand 0']
    %26 = vsyncpa [#allocation7], 0
    %s27 = scalar_lea.sflag [#allocation7], 1
    %28 = vsyncpa %s27, 0
    %29 = vsyncpa [#allocation10], 0
    %s30 = scalar_lea.sflag [#allocation10], 1
    %31 = vsyncpa %s30, 0
    %32 = vsyncpa [#allocation8], 0
    %s33 = scalar_lea.sflag [#allocation8], 1
    %34 = vsyncpa %s33, 0
    loop: start=0, step=1, limit=8
    $region2: #{tpu_custom_call.1} parent=1 // loop_pre_header
      _
    $region3: #{tpu_custom_call.1} parent=1 // loop_header
      %s36 = sphi 0, %s40
      %p37 = scmp.ge.s32.totalorder %s36, 8
      %s43 = sphi 0, %s62
      %s44 = sphi 0, %s58
      %s45 = sphi 0, %s54
      %s46 = sphi 0, %s43
      %s47 = sphi 0, %s44
      %s48 = sphi 0, %s45
      %s49 = sphi 0, %s46
      %s50 = sphi 0, %s47
      %s51 = sphi 0, %s48
      %s65 = sphi 0, %s67
      %s68 = sphi 0, %s65
      %s69 = sphi 0, %s68
      %s85 = sphi 0, %s69
      %s103 = sphi 0, %s105
      %s106 = sphi 0, %s103
      %s107 = sphi 0, %s106
      %s123 = sphi 0, %s107
      %s141 = sphi 0, %s143
      %s144 = sphi 0, %s141
      %s145 = sphi 0, %s144
      %s161 = sphi 0, %s145
      %s167 = sphi 0, %s169
      %s170 = sphi 0, %s167
      %s171 = sphi 0, %s170
      %s187 = sphi 0, %s171
      %s193 = sphi 0, %s195
      %s196 = sphi 0, %s193
      %s197 = sphi 0, %s196
      %s213 = sphi 0, %s197
    $region4: #{tpu_custom_call.1} parent=1 // loop_header_branch
      %39 = sbr.rel (%p37) target = $region8
    $region5: #{tpu_custom_call.1} parent=1 // loop_body
      %s41 = ssub.s32 %s36, 1
      %s42 = ssub.s32 %s36, 2
      %s52 = sadd.s32 1, %s45
      %p53 = scmp.ge.s32.totalorder %s52, 1
      %s54 = scalar_select %p53, 0, %s52
      %s55 = sadd.s32 1, %s44
      %s56 = scalar_select %p53, %s55, %s44
      %p57 = scmp.ge.s32.totalorder %s56, 3
      %s58 = scalar_select %p57, 0, %s56
      %s59 = sadd.s32 1, %s43
      %s60 = scalar_select %p57, %s59, %s43
      %p61 = scmp.ge.s32.totalorder %s60, 2
      %s62 = scalar_select %p61, 0, %s60
      %s63 = ssub.s32 %s43, %s62
      %p64 = scmp.eq.s32.totalorder %s63, 0
      %s66 = sadd.s32 %s65, 1
      %s67 = scalar_select %p64, %s65, %s66
      %p70 = pneg %p64
      %p71 = scmp.eq.s32.totalorder %s36, 5
      %p72 = por %p70, %p71
      %p73 = scmp.ne.s32.totalorder %s65, %s68
      %p74 = scmp.eq.s32.totalorder %s36, 0
      %p75 = por %p73, %p74
      %p76 = scmp.ne.s32.totalorder %s65, %s68
      %p77 = scmp.eq.s32.totalorder %s41, 5
      %p78 = por %p76, %p77
      %p79 = scmp.ne.s32.totalorder %s68, %s69
      %p80 = scmp.eq.s32.totalorder %s41, 0
      %p81 = por %p79, %p80
      %p82 = scmp.ne.s32.totalorder %s68, %s69
      %p83 = scmp.eq.s32.totalorder %s42, 5
      %p84 = por %p82, %p83
      %p86 = scmp.ne.s32.totalorder %s69, %s85
      %p87 = scmp.eq.s32.totalorder %s42, 0
      %p88 = por %p86, %p87
      %s89 = smul.u32 %s43, 3
      %s90 = sadd.s32 %s89, %s44
      %s91 = sadd.s32 %s90, %s45
      %s92 = sld [smem:[#allocation4 + %s91]]
      %s93 = sld [smem:[#allocation5 + %s91]]
      %s94 = smul.u32 %s62, 3
      %s95 = sadd.s32 %s94, %s58
      %s96 = sadd.s32 %s95, %s54
      %s97 = sld [smem:[#allocation4 + %s96]]
      %s98 = sld [smem:[#allocation5 + %s96]]
      %s99 = ssub.s32 %s92, %s97
      %s100 = ssub.s32 %s93, %s98
      %s101 = sor.u32 %s99, %s100
      %p102 = scmp.eq.s32.totalorder %s101, 0
      %s104 = sadd.s32 %s103, 1
      %s105 = scalar_select %p102, %s103, %s104
      %p108 = pneg %p102
      %p109 = scmp.eq.s32.totalorder %s36, 5
      %p110 = por %p108, %p109
      %p111 = scmp.ne.s32.totalorder %s103, %s106
      %p112 = scmp.eq.s32.totalorder %s36, 0
      %p113 = por %p111, %p112
      %p114 = scmp.ne.s32.totalorder %s103, %s106
      %p115 = scmp.eq.s32.totalorder %s41, 5
      %p116 = por %p114, %p115
      %p117 = scmp.ne.s32.totalorder %s106, %s107
      %p118 = scmp.eq.s32.totalorder %s41, 0
      %p119 = por %p117, %p118
      %p120 = scmp.ne.s32.totalorder %s106, %s107
      %p121 = scmp.eq.s32.totalorder %s42, 5
      %p122 = por %p120, %p121
      %p124 = scmp.ne.s32.totalorder %s107, %s123
      %p125 = scmp.eq.s32.totalorder %s42, 0
      %p126 = por %p124, %p125
      %s127 = smul.u32 %s43, 3
      %s128 = sadd.s32 %s127, %s44
      %s129 = sadd.s32 %s128, %s45
      %s130 = sld [smem:[#allocation4 + %s129]]
      %s131 = sld [smem:[#allocation5 + %s129]]
      %s132 = smul.u32 %s62, 3
      %s133 = sadd.s32 %s132, %s58
      %s134 = sadd.s32 %s133, %s54
      %s135 = sld [smem:[#allocation4 + %s134]]
      %s136 = sld [smem:[#allocation5 + %s134]]
      %s137 = ssub.s32 %s130, %s135
      %s138 = ssub.s32 %s131, %s136
      %s139 = sor.u32 %s137, %s138
      %p140 = scmp.eq.s32.totalorder %s139, 0
      %s142 = sadd.s32 %s141, 1
      %s143 = scalar_select %p140, %s141, %s142
      %p146 = pneg %p140
      %p147 = scmp.eq.s32.totalorder %s36, 5
      %p148 = por %p146, %p147
      %p149 = scmp.ne.s32.totalorder %s141, %s144
      %p150 = scmp.eq.s32.totalorder %s36, 0
      %p151 = por %p149, %p150
      %p152 = scmp.ne.s32.totalorder %s141, %s144
      %p153 = scmp.eq.s32.totalorder %s41, 5
      %p154 = por %p152, %p153
      %p155 = scmp.ne.s32.totalorder %s144, %s145
      %p156 = scmp.eq.s32.totalorder %s41, 0
      %p157 = por %p155, %p156
      %p158 = scmp.ne.s32.totalorder %s144, %s145
      %p159 = scmp.eq.s32.totalorder %s42, 5
      %p160 = por %p158, %p159
      %p162 = scmp.ne.s32.totalorder %s145, %s161
      %p163 = scmp.eq.s32.totalorder %s42, 0
      %p164 = por %p162, %p163
      %s165 = ssub.s32 %s43, %s62
      %p166 = scmp.eq.s32.totalorder %s165, 0
      %s168 = sadd.s32 %s167, 1
      %s169 = scalar_select %p166, %s167, %s168
      %p172 = pneg %p166
      %p173 = scmp.eq.s32.totalorder %s36, 5
      %p174 = por %p172, %p173
      %p175 = scmp.ne.s32.totalorder %s167, %s170
      %p176 = scmp.eq.s32.totalorder %s36, 0
      %p177 = por %p175, %p176
      %p178 = scmp.ne.s32.totalorder %s167, %s170
      %p179 = scmp.eq.s32.totalorder %s41, 5
      %p180 = por %p178, %p179
      %p181 = scmp.ne.s32.totalorder %s170, %s171
      %p182 = scmp.eq.s32.totalorder %s41, 0
      %p183 = por %p181, %p182
      %p184 = scmp.ne.s32.totalorder %s170, %s171
      %p185 = scmp.eq.s32.totalorder %s42, 5
      %p186 = por %p184, %p185
      %p188 = scmp.ne.s32.totalorder %s171, %s187
      %p189 = scmp.eq.s32.totalorder %s42, 0
      %p190 = por %p188, %p189
      %s191 = ssub.s32 %s43, %s62
      %p192 = scmp.eq.s32.totalorder %s191, 0
      %s194 = sadd.s32 %s193, 1
      %s195 = scalar_select %p192, %s193, %s194
      %p198 = pneg %p192
      %p199 = scmp.eq.s32.totalorder %s36, 5
      %p200 = por %p198, %p199
      %p201 = scmp.ne.s32.totalorder %s193, %s196
      %p202 = scmp.eq.s32.totalorder %s36, 0
      %p203 = por %p201, %p202
      %p204 = scmp.ne.s32.totalorder %s193, %s196
      %p205 = scmp.eq.s32.totalorder %s41, 5
      %p206 = por %p204, %p205
      %p207 = scmp.ne.s32.totalorder %s196, %s197
      %p208 = scmp.eq.s32.totalorder %s41, 0
      %p209 = por %p207, %p208
      %p210 = scmp.ne.s32.totalorder %s196, %s197
      %p211 = scmp.eq.s32.totalorder %s42, 5
      %p212 = por %p210, %p211
      %p214 = scmp.ne.s32.totalorder %s197, %s213
      %p215 = scmp.eq.s32.totalorder %s42, 0
      %p216 = por %p214, %p215
      %p217 = scmp.le.s32.totalorder 1, %s36
      %p218 = scmp.lt.s32.totalorder %s36, 7
      %p219 = pnand %p217, %p218
      %p220 = pneg %p219
      // Predicated region
      $region9: #{tpu_custom_call.1} parent=5 // pred_check
        _
      $region10: #{tpu_custom_call.1} parent=5 // pred_check_branch
        %222 = sbr.rel (%p219) target = $region12
      $region11: #{tpu_custom_call.1} parent=5 // pred_region
        %s223 = ssub.s32 %s36, 1
      $region12: #{tpu_custom_call.1} parent=5 // pred_fallthru
        _
      %p224 = scmp.lt.s32.totalorder %s36, 6
      // Predicated region
      $region13: #{tpu_custom_call.1} parent=5 // pred_check
        %p225 = pneg %p224
      $region14: #{tpu_custom_call.1} parent=5 // pred_check_branch
        %227 = sbr.rel (%p225) target = $region16
      $region15: #{tpu_custom_call.1} parent=5 // pred_region
        // Predicated region
        $region17: #{tpu_custom_call.1} parent=15 // pred_check
          %p228 = pneg %p75
        $region18: #{tpu_custom_call.1} parent=15 // pred_check_branch
          %230 = sbr.rel (%p228) target = $region20
        $region19: #{tpu_custom_call.1} parent=15 // pred_region
          %p231 = scmp.lt.s32.totalorder %s43, 1
          %s232 = scalar_select %p231, %s43, 1
          %s233 = smul.addr %s232, 8
          %s234 = scalar_lea.vmem %s3, %s233
        $region20: #{tpu_custom_call.1} parent=15 // pred_fallthru
          _
        // Predicated region
        $region21: #{tpu_custom_call.1} parent=15 // pred_check
          %p235 = pneg %p113
        $region22: #{tpu_custom_call.1} parent=15 // pred_check_branch
          %237 = sbr.rel (%p235) target = $region24
        $region23: #{tpu_custom_call.1} parent=15 // pred_region
          %s238 = sand.u32 %s103, 1
          %s239 = scalar_lea.sflag [#allocation7], %s238
          %s240 = sand.u32 %s103, 1
          %s241 = smul.addr %s240, 64
          %s242 = scalar_lea.vmem [#allocation6], %s241
          %s243 = smul.u32 %s43, 3
          %s244 = sadd.s32 %s243, %s44
          %s245 = sadd.s32 %s244, %s45
          %s246 = sld [smem:[#allocation4 + %s245]]
          %s247 = sld [smem:[#allocation5 + %s245]]
          %s249 = ssub.s32 1024, 1024
          %250 = vsyncadd %s239, %s249
          %s251 = smul.addr %s246, 8
          %s252 = sadd.s32 %s247, %s251
          %s253 = smul.addr %s252, 128
          %s254 = scalar_lea.hbm %s4, %s253
          %s255 = sshll.u32 %s242, 4
          %s256 = int_to_ptr.vmem [resolvable:$true] %s255
          %261 = dma.hbm_to_vmem [thread:$0]  %s254, 1024, %s256, %s239, 128, 128, 8
        $region24: #{tpu_custom_call.1} parent=15 // pred_fallthru
          _
        // Predicated region
        $region25: #{tpu_custom_call.1} parent=15 // pred_check
          %p262 = pneg %p151
        $region26: #{tpu_custom_call.1} parent=15 // pred_check_branch
          %264 = sbr.rel (%p262) target = $region28
        $region27: #{tpu_custom_call.1} parent=15 // pred_region
          %s265 = sand.u32 %s141, 1
          %s266 = scalar_lea.sflag [#allocation10], %s265
          %s267 = sand.u32 %s141, 1
          %s268 = smul.addr %s267, 32
          %s269 = scalar_lea.vmem [#allocation9], %s268
          %s270 = smul.u32 %s43, 3
          %s271 = sadd.s32 %s270, %s44
          %s272 = sadd.s32 %s271, %s45
          %s273 = sld [smem:[#allocation4 + %s272]]
          %s274 = sld [smem:[#allocation5 + %s272]]
          %s275 = smul.u32 4, %s274
          %s277 = ssub.s32 512, 512
          %278 = vsyncadd %s266, %s277
          %s279 = smul.addr %s273, 4
          %s280 = sadd.s32 %s275, %s279
          %s281 = smul.addr %s280, 128
          %s282 = scalar_lea.hbm %s5, %s281
          %s283 = sshll.u32 %s269, 4
          %s284 = int_to_ptr.vmem [resolvable:$true] %s283
          %289 = dma.hbm_to_vmem [thread:$0]  %s282, 512, %s284, %s266, 128, 128, 8
        $region28: #{tpu_custom_call.1} parent=15 // pred_fallthru
          _
        // Predicated region
        $region29: #{tpu_custom_call.1} parent=15 // pred_check
          %p290 = pneg %p177
        $region30: #{tpu_custom_call.1} parent=15 // pred_check_branch
          %292 = sbr.rel (%p290) target = $region32
        $region31: #{tpu_custom_call.1} parent=15 // pred_region
          %p293 = scmp.lt.s32.totalorder %s43, 1
          %s294 = scalar_select %p293, %s43, 1
          %s295 = smul.addr %s294, 8
          %s296 = scalar_lea.vmem %s6, %s295
        $region32: #{tpu_custom_call.1} parent=15 // pred_fallthru
          _
      $region16: #{tpu_custom_call.1} parent=5 // pred_fallthru
        _
      %p297 = scmp.le.s32.totalorder 1, %s36
      %p298 = scmp.lt.s32.totalorder %s36, 7
      %p299 = pnand %p297, %p298
      %p300 = pneg %p299
      // Predicated region
      $region33: #{tpu_custom_call.1} parent=5 // pred_check
        _
      $region34: #{tpu_custom_call.1} parent=5 // pred_check_branch
        %302 = sbr.rel (%p299) target = $region36
      $region35: #{tpu_custom_call.1} parent=5 // pred_region
        %s303 = ssub.s32 %s36, 1
        %s304 = sand.u32 %s106, 1
        %s305 = scalar_lea.sflag [#allocation7], %s304
        %s306 = sand.u32 %s106, 1
        %s307 = smul.addr %s306, 64
        %s308 = scalar_lea.vmem [#allocation6], %s307
        // Predicated region
        $region37: #{tpu_custom_call.1} parent=35 // pred_check
          %p309 = pneg %p119
        $region38: #{tpu_custom_call.1} parent=35 // pred_check_branch
          %311 = sbr.rel (%p309) target = $region40
        $region39: #{tpu_custom_call.1} parent=35 // pred_region
          %312 = dma.done %s305, 1024
        $region40: #{tpu_custom_call.1} parent=35 // pred_fallthru
          _
        %s313 = sand.u32 %s144, 1
        %s314 = scalar_lea.sflag [#allocation10], %s313
        %s315 = sand.u32 %s144, 1
        %s316 = smul.addr %s315, 32
        %s317 = scalar_lea.vmem [#allocation9], %s316
        // Predicated region
        $region41: #{tpu_custom_call.1} parent=35 // pred_check
          %p318 = pneg %p157
        $region42: #{tpu_custom_call.1} parent=35 // pred_check_branch
          %320 = sbr.rel (%p318) target = $region44
        $region43: #{tpu_custom_call.1} parent=35 // pred_region
          %321 = dma.done %s314, 512
        $region44: #{tpu_custom_call.1} parent=35 // pred_fallthru
          _
        %p322 = scmp.lt.s32.totalorder %s46, 1
        %s323 = scalar_select %p322, %s46, 1
        %s324 = smul.addr %s323, 8
        %s325 = scalar_lea.vmem %s3, %s324
        %p326 = pneg %p81
        %p327 = pneg %p78
        %s328 = sand.u32 %s106, 1
        %s329 = scalar_lea.sflag [#allocation7], %s328
        %s330 = sand.u32 %s106, 1
        %s331 = smul.addr %s330, 64
        %s332 = scalar_lea.vmem [#allocation6], %s331
        %p333 = pneg %p119
        %p334 = pneg %p116
        %s335 = sand.u32 %s144, 1
        %s336 = scalar_lea.sflag [#allocation10], %s335
        %s337 = sand.u32 %s144, 1
        %s338 = smul.addr %s337, 32
        %s339 = scalar_lea.vmem [#allocation9], %s338
        %p340 = pneg %p157
        %p341 = pneg %p154
        %p342 = scmp.lt.s32.totalorder %s46, 1
        %s343 = scalar_select %p342, %s46, 1
        %s344 = smul.addr %s343, 8
        %s345 = scalar_lea.vmem %s6, %s344
        %p346 = pneg %p183
        %p347 = pneg %p180
        %p348 = pneg %p209
        %p349 = pneg %p206
        %s350 = sand.u32 %s196, 1
        %s351 = scalar_lea.sflag [#allocation8], %s350
        %s352 = sand.u32 %s196, 1
        %s353 = smul.addr %s352, 8
        %s354 = scalar_lea.vmem [#allocation11], %s353
        %p355 = scmp.lt.s32.totalorder %s46, 1
        %s356 = scalar_select %p355, %s46, 1
        %s357 = smul.addr %s356, 8
        %s358 = scalar_lea.vmem %s3, %s357
        %s359 = smul.u32 %s46, 3
        %s360 = sadd.s32 %s359, %s47
        %s361 = sadd.s32 %s360, %s48
        %s362 = sld [smem:[#allocation4 + %s361]]
        %s363 = sld [smem:[#allocation5 + %s361]]
        %s364 = smul.u32 %s46, 3
        %s365 = sadd.s32 %s364, %s47
        %s366 = sadd.s32 %s365, %s48
        %s367 = sld [smem:[#allocation4 + %s366]]
        %s368 = sld [smem:[#allocation5 + %s366]]
        %s369 = smul.u32 4, %s368
        %p370 = scmp.lt.s32.totalorder %s46, 1
        %s371 = scalar_select %p370, %s46, 1
        %s372 = smul.addr %s371, 8
        %s373 = scalar_lea.vmem %s6, %s372
        %p374 = scmp.eq.s32.totalorder %s47, 0
        %p375 = scmp.eq.s32.totalorder %s48, 0
        %p376 = pnand %p374, %p375
        %p377 = pneg %p376
        // Predicated region
        $region45: #{tpu_custom_call.1} parent=35 // pred_check
          _
        $region46: #{tpu_custom_call.1} parent=35 // pred_check_branch
          %379 = sbr.rel (%p376) target = $region48
        $region47: #{tpu_custom_call.1} parent=35 // pred_region
          %vm380 = vcmask 523264
          %381 = vst.msk [vmem:[%s354] sm:$0xff] %vm380, 0.0
        $region48: #{tpu_custom_call.1} parent=35 // pred_fallthru
          _
        %s382 = smul.u32 %s46, 3
        %s383 = sadd.s32 %s382, %s47
        %s384 = sld [smem:[#allocation3 + %s383]]
        %p385 = scmp.ne.s32.totalorder %s384, 0
        // Predicated region
        $region49: #{tpu_custom_call.1} parent=35 // pred_check
          %p386 = pneg %p385
        $region50: #{tpu_custom_call.1} parent=35 // pred_check_branch
          %388 = sbr.rel (%p386) target = $region52
        $region51: #{tpu_custom_call.1} parent=35 // pred_region
          %v389 = vld [vmem:[%s358] sm:$0xff]
          %v390 = vld [vmem:[%s308] sm:$0xff]
          %v391 = vld [vmem:[%s308 + $0x8] sm:$0xff]
          %v392 = vld [vmem:[%s308 + $0x10] sm:$0xff]
          %v393 = vld [vmem:[%s308 + $0x18] sm:$0xff]
          %v394 = vld [vmem:[%s308 + $0x20] sm:$0xff]
          %v395 = vld [vmem:[%s308 + $0x28] sm:$0xff]
          %v396 = vld [vmem:[%s308 + $0x30] sm:$0xff]
          %v397 = vld [vmem:[%s308 + $0x38] sm:$0xff]
          %vm398 = vcmask 523264
          %v400 = vsel %vm398, %v389, 0
          %402 = vmatprep.subr.mxu0 0.0
          %403 = vmatpush1.msra.mxu0 0.0
          %404 = vmatprep.subr.mxu0 0.0
          %405 = vmatpush1.msra.mxu0 0.0
          %406 = vmatprep.subr.mxu0 0.0
          %407 = vmatpush1.msra.mxu0 0.0
          %408 = vmatprep.subr.mxu0 0.0
          %409 = vmatpush1.msra.mxu0 0.0
          %410 = vmatprep.subr.mxu0 0.0
          %411 = vmatpush1.msra.mxu0 0.0
          %412 = vmatprep.subr.mxu0 0.0
          %413 = vmatpush1.msra.mxu0 0.0
          %414 = vmatprep.subr.mxu0 0.0
          %415 = vmatpush1.msra.mxu0 0.0
          %416 = vmatprep.subr.mxu0 0.0
          %417 = vmatpush1.msra.mxu0 0.0
          %418 = vmatprep.subr.mxu0 0.0
          %419 = vmatpush1.msra.mxu0 %v397
          %420 = vmatprep.subr.mxu0 0.0
          %421 = vmatpush1.msra.mxu0 %v396
          %422 = vmatprep.subr.mxu0 0.0
          %423 = vmatpush1.msra.mxu0 %v395
          %424 = vmatprep.subr.mxu0 0.0
          %425 = vmatpush1.msra.mxu0 %v394
          %426 = vmatprep.subr.mxu0 0.0
          %427 = vmatpush1.msra.mxu0 %v393
          %428 = vmatprep.subr.mxu0 0.0
          %429 = vmatpush1.msra.mxu0 %v392
          %430 = vmatprep.subr.mxu0 0.0
          %431 = vmatpush1.msra.mxu0 %v391
          %432 = vmatprep.subr.mxu0 0.0
          %433 = vmatpush1.msra.mxu0 %v390
          %434 = vmatprep.subr.mxu0 0.0
          %435 = vmatpush2.msra.mxu0 0.0
          %436 = vmatprep.subr.mxu0 0.0
          %437 = vmatpush2.msra.mxu0 0.0
          %438 = vmatprep.subr.mxu0 0.0
          %439 = vmatpush2.msra.mxu0 0.0
          %440 = vmatprep.subr.mxu0 0.0
          %441 = vmatpush2.msra.mxu0 0.0
          %442 = vmatprep.subr.mxu0 0.0
          %443 = vmatpush2.msra.mxu0 0.0
          %444 = vmatprep.subr.mxu0 0.0
          %445 = vmatpush2.msra.mxu0 0.0
          %446 = vmatprep.subr.mxu0 0.0
          %447 = vmatpush2.msra.mxu0 0.0
          %448 = vmatprep.subr.mxu0 0.0
          %449 = vmatpush2.msra.mxu0 0.0
          %450 = vmatprep.subr.mxu0 0.0
          %451 = vmatpush2.msra.mxu0 0.0
          %452 = vmatprep.subr.mxu0 0.0
          %453 = vmatpush2.msra.mxu0 0.0
          %454 = vmatprep.subr.mxu0 0.0
          %455 = vmatpush2.msra.mxu0 0.0
          %456 = vmatprep.subr.mxu0 0.0
          %457 = vmatpush2.msra.mxu0 0.0
          %458 = vmatprep.subr.mxu0 0.0
          %459 = vmatpush2.msra.mxu0 0.0
          %460 = vmatprep.subr.mxu0 0.0
          %461 = vmatpush2.msra.mxu0 0.0
          %462 = vmatprep.subr.mxu0 0.0
          %463 = vmatpush2.msra.mxu0 0.0
          %464 = vmatprep.subr.mxu0 0.0
          %465 = vmatpush2.msra.mxu0 0.0
          %466 = vmatprep.mubr.f32.mxu0 0.0
          %467 = vmatmul.mubr.f32.gmra.mxu0 %v400
          %v468 = vpop.f32.mrf.mxu0
          %v469 = vadd.f32 0.0, %v468
          %v470 = vpop.f32.mrf.mxu0
          %471 = vdwg.mxu0
          %v472 = vxor.u32 %v469, 2147483648
          %v473 = vmul.f32 %v472, 1.442695
          %v474 = vpow.pop %v473
          %v475 = vadd.f32 %v474, 1.0
          %v476 = vrcp.pop %v475
          %v477 = vmul.f32 1.0, %v476
          %v478 = vmul.f32 %v469, %v477
          %480 = vrot.lane.b32.xlu0 %v469, 96
          %v481 = vpop.permute.xlu0 %480
          %v483 = vmul.f32 %v478, %v481
          %v484 = vld [vmem:[%s373] sm:$0xff]
          %v485 = vlaneseq
          %v486 = vand.u32 %v485, 127
          %v487 = vstv %s47
          %vm488 = vcmp.eq.s32.totalorder %v486, %v487
          %v489 = vsel %vm488, %v484, 0.0
          %vm490 = vcmask 23552
          %v491 = vsel %vm490, %v489, 0.0
          %492 = vadd.xlane.f32.xlu0 %v491
          %v493 = vpop.xlane.xlu0 %492
          %v494 = vmul.f32 %v483, %v493
          %v495 = vld [vmem:[%s354] sm:$0xff]
          %v496 = vld [vmem:[%s317] sm:$0xff]
          %v497 = vld [vmem:[%s317 + $0x8] sm:$0xff]
          %v498 = vld [vmem:[%s317 + $0x10] sm:$0xff]
          %v499 = vld [vmem:[%s317 + $0x18] sm:$0xff]
          %vm500 = vcmask 261120
          %v502 = vsel %vm500, %v494, 0
          %504 = vmatprep.subr.mxu0 0.0
          %505 = vmatpush1.msra.mxu0 0.0
          %506 = vmatprep.subr.mxu0 0.0
          %507 = vmatpush1.msra.mxu0 0.0
          %508 = vmatprep.subr.mxu0 0.0
          %509 = vmatpush1.msra.mxu0 0.0
          %510 = vmatprep.subr.mxu0 0.0
          %511 = vmatpush1.msra.mxu0 0.0
          %512 = vmatprep.subr.mxu0 0.0
          %513 = vmatpush1.msra.mxu0 0.0
          %514 = vmatprep.subr.mxu0 0.0
          %515 = vmatpush1.msra.mxu0 0.0
          %516 = vmatprep.subr.mxu0 0.0
          %517 = vmatpush1.msra.mxu0 0.0
          %518 = vmatprep.subr.mxu0 0.0
          %519 = vmatpush1.msra.mxu0 0.0
          %520 = vmatprep.subr.mxu0 0.0
          %521 = vmatpush1.msra.mxu0 0.0
          %522 = vmatprep.subr.mxu0 0.0
          %523 = vmatpush1.msra.mxu0 0.0
          %524 = vmatprep.subr.mxu0 0.0
          %525 = vmatpush1.msra.mxu0 0.0
          %526 = vmatprep.subr.mxu0 0.0
          %527 = vmatpush1.msra.mxu0 0.0
          %528 = vmatprep.subr.mxu0 0.0
          %529 = vmatpush1.msra.mxu0 %v499
          %530 = vmatprep.subr.mxu0 0.0
          %531 = vmatpush1.msra.mxu0 %v498
          %532 = vmatprep.subr.mxu0 0.0
          %533 = vmatpush1.msra.mxu0 %v497
          %534 = vmatprep.subr.mxu0 0.0
          %535 = vmatpush1.msra.mxu0 %v496
          %536 = vmatprep.subr.mxu0 0.0
          %537 = vmatpush2.msra.mxu0 0.0
          %538 = vmatprep.subr.mxu0 0.0
          %539 = vmatpush2.msra.mxu0 0.0
          %540 = vmatprep.subr.mxu0 0.0
          %541 = vmatpush2.msra.mxu0 0.0
          %542 = vmatprep.subr.mxu0 0.0
          %543 = vmatpush2.msra.mxu0 0.0
          %544 = vmatprep.subr.mxu0 0.0
          %545 = vmatpush2.msra.mxu0 0.0
          %546 = vmatprep.subr.mxu0 0.0
          %547 = vmatpush2.msra.mxu0 0.0
          %548 = vmatprep.subr.mxu0 0.0
          %549 = vmatpush2.msra.mxu0 0.0
          %550 = vmatprep.subr.mxu0 0.0
          %551 = vmatpush2.msra.mxu0 0.0
          %552 = vmatprep.subr.mxu0 0.0
          %553 = vmatpush2.msra.mxu0 0.0
          %554 = vmatprep.subr.mxu0 0.0
          %555 = vmatpush2.msra.mxu0 0.0
          %556 = vmatprep.subr.mxu0 0.0
          %557 = vmatpush2.msra.mxu0 0.0
          %558 = vmatprep.subr.mxu0 0.0
          %559 = vmatpush2.msra.mxu0 0.0
          %560 = vmatprep.subr.mxu0 0.0
          %561 = vmatpush2.msra.mxu0 0.0
          %562 = vmatprep.subr.mxu0 0.0
          %563 = vmatpush2.msra.mxu0 0.0
          %564 = vmatprep.subr.mxu0 0.0
          %565 = vmatpush2.msra.mxu0 0.0
          %566 = vmatprep.subr.mxu0 0.0
          %567 = vmatpush2.msra.mxu0 0.0
          %568 = vmatprep.mubr.f32.mxu0 0.0
          %569 = vmatmul.mubr.f32.gmra.mxu0 %v502
          %v570 = vpop.f32.mrf.mxu0
          %v571 = vadd.f32 0.0, %v570
          %v572 = vpop.f32.mrf.mxu0
          %573 = vdwg.mxu0
          %v574 = vadd.f32 %v495, %v571
          %575 = vst.msk [vmem:[%s354] sm:$0xff] %vm398, %v574
        $region52: #{tpu_custom_call.1} parent=35 // pred_fallthru
          _
        %s576 = sand.u32 %s196, 1
        %s577 = scalar_lea.sflag [#allocation8], %s576
        %s578 = sand.u32 %s196, 1
        %s579 = smul.addr %s578, 8
        %s580 = scalar_lea.vmem [#allocation11], %s579
        // Predicated region
        $region53: #{tpu_custom_call.1} parent=35 // pred_check
          %p581 = pneg %p206
        $region54: #{tpu_custom_call.1} parent=35 // pred_check_branch
          %583 = sbr.rel (%p581) target = $region56
        $region55: #{tpu_custom_call.1} parent=35 // pred_region
          %s585 = ssub.s32 128, 128
          %586 = vsyncadd %s577, %s585
          %s587 = smul.addr %s46, 128
          %s588 = scalar_lea.hbm %s7, %s587
          %s590 = sshll.u32 %s580, 4
          %s591 = int_to_ptr.vmem [resolvable:$true] %s590
          %593 = dma.vmem_to_hbm [thread:$0]  %s591, 128, %s588, %s577
        $region56: #{tpu_custom_call.1} parent=35 // pred_fallthru
          _
      $region36: #{tpu_custom_call.1} parent=5 // pred_fallthru
        _
      %p594 = scmp.le.s32.totalorder 2, %s36
      // Predicated region
      $region57: #{tpu_custom_call.1} parent=5 // pred_check
        %p595 = pneg %p594
      $region58: #{tpu_custom_call.1} parent=5 // pred_check_branch
        %597 = sbr.rel (%p595) target = $region60
      $region59: #{tpu_custom_call.1} parent=5 // pred_region
        %s598 = ssub.s32 %s36, 2
        // Predicated region
        $region61: #{tpu_custom_call.1} parent=59 // pred_check
          %p599 = pneg %p212
        $region62: #{tpu_custom_call.1} parent=59 // pred_check_branch
          %601 = sbr.rel (%p599) target = $region64
        $region63: #{tpu_custom_call.1} parent=59 // pred_region
          %s602 = sand.u32 %s197, 1
          %s603 = scalar_lea.sflag [#allocation8], %s602
          %s604 = sand.u32 %s197, 1
          %s605 = smul.addr %s604, 8
          %s606 = scalar_lea.vmem [#allocation11], %s605
          %607 = dma.done %s603, 128
        $region64: #{tpu_custom_call.1} parent=59 // pred_fallthru
          _
      $region60: #{tpu_custom_call.1} parent=5 // pred_fallthru
        _
    $region6: #{tpu_custom_call.1} parent=1 // loop_footer
      %s40 = sadd.s32 1, %s36
    $region7: #{tpu_custom_call.1} parent=1 // loop_footer_branch
      %35 = sbr.rel target = $region3
    $region8: #{tpu_custom_call.1} parent=1 // loop_exit
      _
    %608 = vsyncpa [#allocation7], 1
    %s609 = scalar_lea.sflag [#allocation7], 1
    %610 = vsyncpa %s609, 1
    %611 = vsyncpa [#allocation10], 1
    %s612 = scalar_lea.sflag [#allocation10], 1
    %613 = vsyncpa %s612, 1
    %614 = vsyncpa [#allocation8], 1
    %s615 = scalar_lea.sflag [#allocation8], 1
    %616 = vsyncpa %s615, 1

</llo_original>
